<compile_context>
chip_gen: v5e
topology: v5e:2x2
jax: 0.10.0
libtpu: 0.0.40
codegen_flags: <defaults>
</compile_context>

<pallas_src>
import jax
import jax.numpy as jnp
from jax.experimental import pallas as pl
from jax.experimental.pallas import tpu as pltpu


_VMEM_LIMIT_BYTES = 32 * 1024 * 1024   # raise v5e's 16 MiB scoped default; safe on v6e/v7x
_H_TILE_BUDGET = 16 * 1024 * 1024      # bytes allotted to the double-buffered h tile


# --------------------------------------------------------------------------
# Kernel 1: per-node scores  y = h @ p_hat  (p_hat already L2-normalized)
# --------------------------------------------------------------------------
def _score_kernel(h_ref, p_ref, score_ref):
    h = h_ref[...].astype(jnp.float32)                       # (tile_n, D)
    p = p_ref[...]                                           # (1, D) lane-dense
    score_ref[...] = jnp.sum(h * p, axis=-1, keepdims=True)  # (tile_n, 1)


def _derive_tile_n(n, d, itemsize):
    """Biggest node tile that fits the VMEM budget; keep >=2 grid steps."""
    t = max(16, min(1024, _H_TILE_BUDGET // (2 * d * itemsize)))
    t = min(t, max(16, pl.cdiv(n, 2)))      # >=2 iterations so v7x megacore can split
    return max(16, (t // 16) * 16)          # sublane-friendly (f32 needs 8, bf16 needs 16)


def gpool_scores(h, p_hat, *, tile_n=None):
    """Pallas call: streams h (N, D) and emits per-node scores (N,)."""
    n, d = h.shape
    itemsize = h.dtype.itemsize
    if tile_n is None:
        tile_n = _derive_tile_n(n, d, itemsize)
    n_pad = pl.cdiv(n, tile_n) * tile_n
    if n_pad != n:
        h = jnp.pad(h, ((0, n_pad - n), (0, 0)))             # padded rows score to 0, sliced off below

    score = pl.pallas_call(
        _score_kernel,
        out_shape=jax.ShapeDtypeStruct((n_pad, 1), jnp.float32),
        grid_spec=pltpu.PrefetchScalarGridSpec(
            num_scalar_prefetch=0,
            grid=(n_pad // tile_n,),
            in_specs=[pl.BlockSpec((tile_n, d), lambda i: (i, 0)),
                      pl.BlockSpec((1, d), lambda i: (0, 0))],
            out_specs=pl.BlockSpec((tile_n, 1), lambda i: (i, 0)),
        ),
        compiler_params=pltpu.CompilerParams(
            dimension_semantics=("parallel",),
            vmem_limit_bytes=_VMEM_LIMIT_BYTES),
        cost_estimate=pl.CostEstimate(
            flops=2 * n_pad * d,
            transcendentals=0,
            bytes_accessed=n_pad * d * itemsize + n_pad * 4 + d * 4),
    )(h, p_hat)
    return score[:n, 0]


# --------------------------------------------------------------------------
# Kernel 2: fused row-gather + tanh gating of the selected nodes only.
# Scalar-prefetched indices drive a pl.Element row gather on h.
# --------------------------------------------------------------------------
def _gather_gate_kernel(idx_ref, h_ref, p_ref, out_ref):
    del idx_ref                                               # consumed by index_maps
    row = h_ref[0].astype(jnp.float32)                        # (1, D) selected row
    p = p_ref[...]                                            # (1, D)
    y = jnp.sum(row * p, axis=-1, keepdims=True)              # (1, 1) score
    out_ref[0] = (row * jnp.tanh(y)).astype(out_ref.dtype)


def gpool_gather_gate(h, p_hat, idx):
    """Reads only the selected rows of h, gates them, writes (B*k, D)."""
    n, d = h.shape
    nk = idx.shape[0]
    itemsize = h.dtype.itemsize
    h3 = h.reshape(n, 1, d)                                   # keep last-two dims tile-legal

    out = pl.pallas_call(
        _gather_gate_kernel,
        out_shape=jax.ShapeDtypeStruct((nk, 1, d), h.dtype),
        grid_spec=pltpu.PrefetchScalarGridSpec(
            num_scalar_prefetch=1,                            # idx lands in SMEM
            grid=(nk,),
            in_specs=[pl.BlockSpec((pl.Element(1), 1, d),
                                   lambda i, idx_ref: (idx_ref[i], 0, 0)),
                      pl.BlockSpec((1, d), lambda i, idx_ref: (0, 0))],
            out_specs=pl.BlockSpec((1, 1, d), lambda i, idx_ref: (i, 0, 0)),
        ),
        compiler_params=pltpu.CompilerParams(
            dimension_semantics=("arbitrary",),
            vmem_limit_bytes=_VMEM_LIMIT_BYTES),
        cost_estimate=pl.CostEstimate(
            flops=3 * nk * d,
            transcendentals=nk,
            bytes_accessed=2 * nk * d * itemsize + d * 4),
    )(idx, h3, p_hat)
    return out.reshape(nk, d)


# --------------------------------------------------------------------------
# Full gPool forward.  Graphs are contiguous in `batch` with equal size.
# --------------------------------------------------------------------------
def graph_unet_pool(h, edge_index, edge_attr, batch, p, *,
                    k, num_graphs, nodes_per_graph):
    n, d = h.shape
    nk = num_graphs * k

    # projection norm hoisted out of the kernel (constant per call)
    p_row = p.reshape(1, d).astype(jnp.float32)
    p_hat = p_row / jnp.sqrt(jnp.sum(p_row * p_row))

    # 1) per-node scores (Pallas, HBM stream over h)
    score = gpool_scores(h, p_hat)                            # (N,)

    # 2) per-graph top-k (plain JAX; dynamic ranking)
    score_g = score.reshape(num_graphs, nodes_per_graph)
    _, local_idx = jax.lax.top_k(score_g, k)                  # (B, k)
    global_idx = (local_idx
                  + jnp.arange(num_graphs)[:, None] * nodes_per_graph
                  ).reshape(-1).astype(jnp.int32)             # (B*k,)

    # 3) fused gather + tanh gating of only the selected rows (Pallas)
    h_pooled = gpool_gather_gate(h, p_hat, global_idx)        # (B*k, D)

    batch_pooled = jnp.repeat(jnp.arange(num_graphs, dtype=batch.dtype), k)

    # 4) pooled adjacency built directly at (B*k, B*k) from the edge list —
    #    edges with an unselected endpoint are routed to a padding row/col.
    new_id = jnp.full((n,), nk, dtype=jnp.int32).at[global_idx].set(
        jnp.arange(nk, dtype=jnp.int32))
    src = new_id[edge_index[0]]
    dst = new_id[edge_index[1]]
    w = edge_attr[:, 0].astype(h.dtype)
    adj_pad = jnp.zeros((nk + 1, nk + 1), h.dtype).at[src, dst].set(w)
    # TODO(synk): Graph U-Net augments connectivity with A^2 before selection;
    # plain sub-selection of A is used here.
    adj_pooled = adj_pad[:nk, :nk]

    return h_pooled, adj_pooled, batch_pooled, global_idx


if __name__ == "__main__":
    # small, deterministic example shapes
    num_graphs = 2
    nodes_per_graph = 16
    N = num_graphs * nodes_per_graph       # 32 nodes total
    D = 32                                 # emb_dim
    k = 8                                  # nodes kept per graph

    key = jax.random.PRNGKey(0)
    kh, kp, ke = jax.random.split(key, 3)

    h = jax.random.normal(kh, (N, D), dtype=jnp.float32)

    # deterministic parameter init (projection vector of GraphUnetPool)
    p = (jax.random.normal(kp, (D, 1), dtype=jnp.float32)
         * (1.0 / jnp.sqrt(jnp.float32(D))))

    # ring edges within each graph (bidirectional)
    src, dst = [], []
    for g in range(num_graphs):
        base = g * nodes_per_graph
        for i in range(nodes_per_graph):
            j = (i + 1) % nodes_per_graph
            src += [base + i, base + j]
            dst += [base + j, base + i]
    edge_index = jnp.array([src, dst], dtype=jnp.int32)      # (2, E)
    E = edge_index.shape[1]
    edge_attr = jax.random.uniform(ke, (E, 1), dtype=jnp.float32)

    batch = jnp.repeat(jnp.arange(num_graphs, dtype=jnp.int32),
                       nodes_per_graph)

    h_pooled, adj_pooled, batch_pooled, idx = graph_unet_pool(
        h, edge_index, edge_attr, batch, p,
        k=k, num_graphs=num_graphs, nodes_per_graph=nodes_per_graph)

    jax.block_until_ready((h_pooled, adj_pooled, batch_pooled, idx))

    assert h_pooled.shape == (num_graphs * k, D)
    assert adj_pooled.shape == (num_graphs * k, num_graphs * k)
    assert batch_pooled.shape == (num_graphs * k,)

    # pure-JAX reference check
    p_hat_ref = (p / jnp.sqrt(jnp.sum(p * p))).reshape(D)
    y_ref = h @ p_hat_ref
    gated_ref = h * jnp.tanh(y_ref)[:, None]
    h_pooled_ref = gated_ref[idx]
    adj_ref = jnp.zeros((N, N), h.dtype).at[
        edge_index[0], edge_index[1]].set(edge_attr[:, 0])
    adj_pooled_ref = adj_ref[idx][:, idx]
    assert jnp.allclose(h_pooled, h_pooled_ref, rtol=1e-4, atol=1e-5)
    assert jnp.allclose(adj_pooled, adj_pooled_ref, rtol=1e-5, atol=1e-6)

    print("KERNEL_OK")
</pallas_src>

<mosaic_0001>
module attributes {stable_mosaic.version = 11 : i64} {
  func.func @_score_kernel(%arg0: i32, %arg1: memref<16x32xf32, #tpu.memory_space<vmem>>, %arg2: memref<1x32xf32, #tpu.memory_space<vmem>>, %arg3: memref<16x1xf32, #tpu.memory_space<vmem>>) attributes {dimension_semantics = [#tpu.dimension_semantics<parallel>], iteration_bounds = array<i64: 2>, scalar_prefetch = 0 : i64, scratch_operands = 0 : i64, tpu.core_type = #tpu.core_type<tc>, window_params = [{transform_indices = @transform_0, window_bounds = array<i64: 16, 32>}, {pipeline_mode = #tpu.pipeline_mode<synchronous>, transform_indices = @transform_1, window_bounds = array<i64: 1, 32>}, {transform_indices = @transform_2, window_bounds = array<i64: 16, 1>}]} {
    %c0 = arith.constant 0 : index
    %c0_0 = arith.constant 0 : index
    %0 = vector.load %arg1[%c0, %c0_0] : memref<16x32xf32, #tpu.memory_space<vmem>>, vector<16x32xf32>
    %c0_1 = arith.constant 0 : index
    %c0_2 = arith.constant 0 : index
    %1 = vector.load %arg2[%c0_1, %c0_2] : memref<1x32xf32, #tpu.memory_space<vmem>>, vector<1x32xf32>
    %2 = vector.broadcast %1 : vector<1x32xf32> to vector<16x32xf32>
    %3 = arith.mulf %0, %2 : vector<16x32xf32>
    %cst = arith.constant dense<0.000000e+00> : vector<16xf32>
    %4 = vector.multi_reduction <add>, %3, %cst [1] : vector<16x32xf32> to vector<16xf32>
    %5 = vector.shape_cast %4 : vector<16xf32> to vector<16x1xf32>
    %c0_3 = arith.constant 0 : index
    %c0_4 = arith.constant 0 : index
    %6 = vector.load %arg3[%c0_3, %c0_4] : memref<16x1xf32, #tpu.memory_space<vmem>>, vector<16x1xf32>
    tpu.vector_store %arg3[%c0_3, %c0_4], %5 {strides = array<i32>} : memref<16x1xf32, #tpu.memory_space<vmem>>, vector<16x1xf32>,
    return
  }
  func.func @transform_0(%arg0: i32) -> (i32, i32) {
    %c0_i32 = arith.constant 0 : i32
    %c0_i32_0 = arith.constant 0 : i32
    return %arg0, %c0_i32 : i32, i32
  }
  func.func @transform_1(%arg0: i32) -> (i32, i32) {
    %c0_i32 = arith.constant 0 : i32
    %c0_i32_0 = arith.constant 0 : i32
    %c0_i32_1 = arith.constant 0 : i32
    return %c0_i32, %c0_i32_0 : i32, i32
  }
  func.func @transform_2(%arg0: i32) -> (i32, i32) {
    %c0_i32 = arith.constant 0 : i32
    %c0_i32_0 = arith.constant 0 : i32
    return %arg0, %c0_i32 : i32, i32
  }
}

</mosaic_0001>

<llo_original>
// kernel: tpu_custom_call.1
$region0: #{tpu_custom_call.1}
  #allocation0 [shape = 'u32[]', space=smem, size = 0x4, offset = 0x4, fixed_abs, tag = 'smem constant byte address 0x4 - core index']
  #allocation1 [shape = 'u32[72,128]{1,0:T(1,128)}', space=vmem, size = 0x9000, scoped, tag = 'internal scratch']
  %s0 = inlined_call_operand.hbm [shape: f32[32,32], index: 0, kind: input, shape index: {}]
  %s1 = inlined_call_operand.hbm [shape: f32[1,32], index: 1, kind: input, shape index: {}]
  %s2 = inlined_call_operand.vmem [shape: f32[32,1], index: 2, kind: output, shape index: {}]
  %s3 = sld [smem:[#allocation0]]
  $region49: #{tpu_custom_call.1} parent=0
    _
  %s5 = ssub.s32 1, %s3
  %s6 = scalar_select 0, %s5, %s3
  $region1: #{tpu_custom_call.1} parent=0
    #allocation2 [shape = 'u8[16384]{0}', space=vmem, size = 0x4000, scoped, tag = 'input window, operand 0']
    #allocation3 [shape = 's32[2]{0}', space=sflag, size = 0x8, scoped, tag = 'scoped memory for tpu_custom_call.1']
    #allocation4 [shape = 'u8[512]{0}', space=vmem, size = 0x400, scoped, tag = 'input window, operand 1, single buffered']
    #allocation5 [shape = 's32[1]{0}', space=sflag, size = 0x4, scoped, tag = 'scoped memory for tpu_custom_call.1']
    %7 = vsyncpa [#allocation3], 0
    %s8 = scalar_lea.sflag [#allocation3], 1
    %9 = vsyncpa %s8, 0
    %10 = vsyncpa [#allocation5], 0
    loop: start=0, step=1, limit=4
    $region2: #{tpu_custom_call.1} parent=1 // loop_pre_header
      _
    $region3: #{tpu_custom_call.1} parent=1 // loop_header
      %s12 = sphi 0, %s16
      %p13 = scmp.ge.s32.totalorder %s12, 4
      %s22 = sphi 0, %s24
      %s25 = sphi 0, %s22
      %s26 = sphi 0, %s25
      %s42 = sphi 0, %s26
      %s46 = sphi 0, %s46
      %s48 = sphi 0, %s46
      %s49 = sphi 0, %s48
      %s63 = sphi 0, %s49
      %s69 = sphi 0, %s71
      %s72 = sphi 0, %s69
      %s73 = sphi 0, %s72
      %s89 = sphi 0, %s73
    $region4: #{tpu_custom_call.1} parent=1 // loop_header_branch
      %15 = sbr.rel (%p13) target = $region8
    $region5: #{tpu_custom_call.1} parent=1 // loop_body
      %s17 = ssub.s32 %s12, 1
      %s18 = ssub.s32 %s12, 2
      %s19 = sadd.s32 %s12, 1
      %s20 = ssub.s32 %s12, %s19
      %p21 = scmp.eq.s32.totalorder %s20, 0
      %s23 = sadd.s32 %s22, 1
      %s24 = scalar_select %p21, %s22, %s23
      %p27 = pneg %p21
      %p28 = scmp.eq.s32.totalorder %s12, 1
      %p29 = por %p27, %p28
      %p30 = scmp.ne.s32.totalorder %s22, %s25
      %p31 = scmp.eq.s32.totalorder %s12, 0
      %p32 = por %p30, %p31
      %p33 = scmp.ne.s32.totalorder %s22, %s25
      %p34 = scmp.eq.s32.totalorder %s17, 1
      %p35 = por %p33, %p34
      %p36 = scmp.ne.s32.totalorder %s25, %s26
      %p37 = scmp.eq.s32.totalorder %s17, 0
      %p38 = por %p36, %p37
      %p39 = scmp.ne.s32.totalorder %s25, %s26
      %p40 = scmp.eq.s32.totalorder %s18, 1
      %p41 = por %p39, %p40
      %p43 = scmp.ne.s32.totalorder %s26, %s42
      %p44 = scmp.eq.s32.totalorder %s18, 0
      %p45 = por %p43, %p44
      %s47 = sadd.s32 %s46, 1
      %p50 = scmp.eq.s32.totalorder %s12, 1
      %p51 = scmp.ne.s32.totalorder %s46, %s48
      %p52 = scmp.eq.s32.totalorder %s12, 0
      %p53 = por %p51, %p52
      %p54 = scmp.ne.s32.totalorder %s46, %s48
      %p55 = scmp.eq.s32.totalorder %s17, 1
      %p56 = por %p54, %p55
      %p57 = scmp.ne.s32.totalorder %s48, %s49
      %p58 = scmp.eq.s32.totalorder %s17, 0
      %p59 = por %p57, %p58
      %p60 = scmp.ne.s32.totalorder %s48, %s49
      %p61 = scmp.eq.s32.totalorder %s18, 1
      %p62 = por %p60, %p61
      %p64 = scmp.ne.s32.totalorder %s49, %s63
      %p65 = scmp.eq.s32.totalorder %s18, 0
      %p66 = por %p64, %p65
      %s67 = ssub.s32 %s12, %s19
      %p68 = scmp.eq.s32.totalorder %s67, 0
      %s70 = sadd.s32 %s69, 1
      %s71 = scalar_select %p68, %s69, %s70
      %p74 = pneg %p68
      %p75 = scmp.eq.s32.totalorder %s12, 1
      %p76 = por %p74, %p75
      %p77 = scmp.ne.s32.totalorder %s69, %s72
      %p78 = scmp.eq.s32.totalorder %s12, 0
      %p79 = por %p77, %p78
      %p80 = scmp.ne.s32.totalorder %s69, %s72
      %p81 = scmp.eq.s32.totalorder %s17, 1
      %p82 = por %p80, %p81
      %p83 = scmp.ne.s32.totalorder %s72, %s73
      %p84 = scmp.eq.s32.totalorder %s17, 0
      %p85 = por %p83, %p84
      %p86 = scmp.ne.s32.totalorder %s72, %s73
      %p87 = scmp.eq.s32.totalorder %s18, 1
      %p88 = por %p86, %p87
      %p90 = scmp.ne.s32.totalorder %s73, %s89
      %p91 = scmp.eq.s32.totalorder %s18, 0
      %p92 = por %p90, %p91
      %p93 = scmp.le.s32.totalorder 1, %s12
      %p94 = scmp.lt.s32.totalorder %s12, 3
      %p95 = pnand %p93, %p94
      %p96 = pneg %p95
      // Predicated region
      $region9: #{tpu_custom_call.1} parent=5 // pred_check
        _
      $region10: #{tpu_custom_call.1} parent=5 // pred_check_branch
        %98 = sbr.rel (%p95) target = $region12
      $region11: #{tpu_custom_call.1} parent=5 // pred_region
        %s99 = ssub.s32 %s12, 1
        // Predicated region
        $region13: #{tpu_custom_call.1} parent=11 // pred_check
          %p100 = pneg %p59
        $region14: #{tpu_custom_call.1} parent=11 // pred_check_branch
          %102 = sbr.rel (%p100) target = $region16
        $region15: #{tpu_custom_call.1} parent=11 // pred_region
          %104 = vsyncadd [#allocation5], 0
          %s106 = sshll.u32 %s1, 4
          %s107 = int_to_ptr.hbm [resolvable:$true] %s106
          %s108 = sshll.u32 [#allocation4], 4
          %s109 = int_to_ptr.vmem [resolvable:$true] %s108
          %111 = dma.hbm_to_vmem [thread:$0]  %s107, 16, %s109, [#allocation5]
        $region16: #{tpu_custom_call.1} parent=11 // pred_fallthru
          _
      $region12: #{tpu_custom_call.1} parent=5 // pred_fallthru
        _
      %p112 = scmp.lt.s32.totalorder %s12, 2
      // Predicated region
      $region17: #{tpu_custom_call.1} parent=5 // pred_check
        %p113 = pneg %p112
      $region18: #{tpu_custom_call.1} parent=5 // pred_check_branch
        %115 = sbr.rel (%p113) target = $region20
      $region19: #{tpu_custom_call.1} parent=5 // pred_region
        // Predicated region
        $region21: #{tpu_custom_call.1} parent=19 // pred_check
          %p116 = pneg %p32
        $region22: #{tpu_custom_call.1} parent=19 // pred_check_branch
          %118 = sbr.rel (%p116) target = $region24
        $region23: #{tpu_custom_call.1} parent=19 // pred_region
          %s119 = sand.u32 %s22, 1
          %s120 = scalar_lea.sflag [#allocation3], %s119
          %s121 = sand.u32 %s22, 1
          %s122 = smul.addr %s121, 16
          %s123 = scalar_lea.vmem [#allocation2], %s122
          %s124 = smul.u32 2, %s12
          %126 = vsyncadd %s120, 0
          %s127 = smul.addr %s124, 8
          %s128 = scalar_lea.hbm %s0, %s127
          %s129 = sshll.u32 %s128, 4
          %s130 = int_to_ptr.hbm [resolvable:$true] %s129
          %s131 = sshll.u32 %s123, 4
          %s132 = int_to_ptr.vmem [resolvable:$true] %s131
          %137 = dma.hbm_to_vmem [thread:$0]  %s130, 256, %s132, %s120, 128, 128, 8
        $region24: #{tpu_custom_call.1} parent=19 // pred_fallthru
          _
      $region20: #{tpu_custom_call.1} parent=5 // pred_fallthru
        _
      %p138 = scmp.le.s32.totalorder 1, %s12
      %p139 = scmp.lt.s32.totalorder %s12, 3
      %p140 = pnand %p138, %p139
      %p141 = pneg %p140
      // Predicated region
      $region25: #{tpu_custom_call.1} parent=5 // pred_check
        _
      $region26: #{tpu_custom_call.1} parent=5 // pred_check_branch
        %143 = sbr.rel (%p140) target = $region28
      $region27: #{tpu_custom_call.1} parent=5 // pred_region
        %s144 = ssub.s32 %s12, 1
        %s145 = sand.u32 %s25, 1
        %s146 = scalar_lea.sflag [#allocation3], %s145
        %s147 = sand.u32 %s25, 1
        %s148 = smul.addr %s147, 16
        %s149 = scalar_lea.vmem [#allocation2], %s148
        // Predicated region
        $region29: #{tpu_custom_call.1} parent=27 // pred_check
          %p150 = pneg %p38
        $region30: #{tpu_custom_call.1} parent=27 // pred_check_branch
          %152 = sbr.rel (%p150) target = $region32
        $region31: #{tpu_custom_call.1} parent=27 // pred_region
          %154 = dma.done %s146, 256
        $region32: #{tpu_custom_call.1} parent=27 // pred_fallthru
          _
        // Predicated region
        $region33: #{tpu_custom_call.1} parent=27 // pred_check
          %p155 = pneg %p59
        $region34: #{tpu_custom_call.1} parent=27 // pred_check_branch
          %157 = sbr.rel (%p155) target = $region36
        $region35: #{tpu_custom_call.1} parent=27 // pred_region
          %159 = dma.done [#allocation5], 16
        $region36: #{tpu_custom_call.1} parent=27 // pred_fallthru
          _
        %s160 = sand.u32 %s25, 1
        %s161 = scalar_lea.sflag [#allocation3], %s160
        %s162 = sand.u32 %s25, 1
        %s163 = smul.addr %s162, 16
        %s164 = scalar_lea.vmem [#allocation2], %s163
        %p165 = pneg %p38
        %p166 = pneg %p35
        %p167 = pneg %p59
        %p168 = pneg %p56
        %p169 = pneg %p85
        %p170 = pneg %p82
        %s171 = smul.u32 2, %s17
        %p172 = scmp.lt.s32.totalorder %s171, 3
        %s173 = scalar_select %p172, %s171, 3
        %s174 = smul.addr %s173, 8
        %s175 = scalar_lea.vmem %s2, %s174
        %s176 = smul.u32 2, %s17
        %s177 = smul.u32 2, %s17
        %p178 = scmp.lt.s32.totalorder %s177, 3
        %s179 = scalar_select %p178, %s177, 3
        %s180 = smul.addr %s179, 8
        %s181 = scalar_lea.vmem %s2, %s180
        %s182 = smul.u32 2, %s17
        %v183 = vld [vmem:[%s149] sm:$0xff]
        %v184 = vld [vmem:[%s149 + $0x8] sm:$0xff]
        %v185 = vld [vmem:[#allocation4] sm:$0x1]
        %v187 = vperm.slane %v185, 0
        %v189 = vmul.f32 %v183, %v187
        %v190 = vmul.f32 %v184, %v187
        %vm191 = vcmask 261120
        %v192 = vsel %vm191, %v189, 0.0
        %193 = vadd.xlane.f32.xlu0 %v192
        %v194 = vpop.xlane.xlu0 %193
        %v195 = vsel %vm191, %v190, 0.0
        %196 = vadd.xlane.f32.xlu0 %v195
        %v197 = vpop.xlane.xlu0 %196
        %vm198 = vcmask 7168
        %199 = vst.msk [vmem:[%s181] sm:$0xff] %vm198, %v194
        %200 = vst.msk [vmem:[%s181 + $0x8] sm:$0xff] %vm198, %v197
        %s201 = smul.u32 2, %s17
        %p202 = scmp.lt.s32.totalorder %s201, 3
        %s203 = scalar_select %p202, %s201, 3
        %s204 = smul.addr %s203, 8
        %s205 = scalar_lea.vmem %s2, %s204
        // Predicated region
        $region37: #{tpu_custom_call.1} parent=27 // pred_check
          %p206 = pneg %p82
        $region38: #{tpu_custom_call.1} parent=27 // pred_check_branch
          %208 = sbr.rel (%p206) target = $region40
        $region39: #{tpu_custom_call.1} parent=27 // pred_region
          %s209 = smul.u32 2, %s17
        $region40: #{tpu_custom_call.1} parent=27 // pred_fallthru
          _
      $region28: #{tpu_custom_call.1} parent=5 // pred_fallthru
        _
      %p210 = scmp.le.s32.totalorder 2, %s12
      // Predicated region
      $region41: #{tpu_custom_call.1} parent=5 // pred_check
        %p211 = pneg %p210
      $region42: #{tpu_custom_call.1} parent=5 // pred_check_branch
        %213 = sbr.rel (%p211) target = $region44
      $region43: #{tpu_custom_call.1} parent=5 // pred_region
        %s214 = ssub.s32 %s12, 2
        // Predicated region
        $region45: #{tpu_custom_call.1} parent=43 // pred_check
          %p215 = pneg %p88
        $region46: #{tpu_custom_call.1} parent=43 // pred_check_branch
          %217 = sbr.rel (%p215) target = $region48
        $region47: #{tpu_custom_call.1} parent=43 // pred_region
          %s218 = smul.u32 2, %s18
          %p219 = scmp.lt.s32.totalorder %s218, 3
          %s220 = scalar_select %p219, %s218, 3
          %s221 = smul.addr %s220, 8
          %s222 = scalar_lea.vmem %s2, %s221
        $region48: #{tpu_custom_call.1} parent=43 // pred_fallthru
          _
      $region44: #{tpu_custom_call.1} parent=5 // pred_fallthru
        _
    $region6: #{tpu_custom_call.1} parent=1 // loop_footer
      %s16 = sadd.s32 1, %s12
    $region7: #{tpu_custom_call.1} parent=1 // loop_footer_branch
      %11 = sbr.rel target = $region3
    $region8: #{tpu_custom_call.1} parent=1 // loop_exit
      _
    %223 = vsyncpa [#allocation3], 1
    %s224 = scalar_lea.sflag [#allocation3], 1
    %225 = vsyncpa %s224, 1
    %226 = vsyncpa [#allocation5], 1

</llo_original>
